<compile_context>
chip_gen: v7x
topology: tpu7x:2x2x1
jax: 0.10.0
libtpu: 0.0.40
codegen_flags: <defaults>
</compile_context>

<pallas_src>
import math

import jax
import jax.numpy as jnp
from jax.experimental import pallas as pl
from jax.experimental.pallas import tpu as pltpu


def _round_up(x, m):
    return ((x + m - 1) // m) * m


# -----------------------------------------------------------------------------
# Linear (y = x @ W + b) Pallas kernel, tiled over rows, lane-dense outputs.
# -----------------------------------------------------------------------------
def _make_linear_kernel(compute_dtype):
    def kernel(x_ref, w_ref, b_ref, o_ref):
        x = x_ref[...]
        if compute_dtype is not None:
            x = x.astype(compute_dtype)
        o_ref[...] = (
            jnp.dot(x, w_ref[...], preferred_element_type=jnp.float32)
            + b_ref[...]
        ).astype(o_ref.dtype)
    return kernel


def pallas_linear(x, w, b, *, out_dtype=jnp.float32, compute_dtype=None,
                  tile_m=512):
    """x: (M, K), w: (K, Nout), b: (Nout,) -> (M, Nout) in out_dtype.

    Nout is padded to a multiple of 128 internally so the output store is
    lane-dense (no vst.msk); padding is sliced off on return (fused by XLA).
    """
    M, K = x.shape
    Nout = w.shape[1]
    Np = _round_up(Nout, 128)
    if Np != Nout:
        w = jnp.concatenate([w, jnp.zeros((K, Np - Nout), w.dtype)], axis=1)
        b = jnp.concatenate([b, jnp.zeros((Np - Nout,), b.dtype)], axis=0)
    if compute_dtype is not None:
        w = w.astype(compute_dtype)
    tm = M if M <= tile_m else (tile_m // 8) * 8
    out = pl.pallas_call(
        _make_linear_kernel(compute_dtype),
        out_shape=jax.ShapeDtypeStruct((M, Np), out_dtype),
        grid=(pl.cdiv(M, tm),),
        in_specs=[
            pl.BlockSpec((tm, K), lambda i: (i, 0)),
            pl.BlockSpec((K, Np), lambda i: (0, 0)),
            pl.BlockSpec((1, Np), lambda i: (0, 0)),
        ],
        out_specs=pl.BlockSpec((tm, Np), lambda i: (i, 0)),
        compiler_params=pltpu.CompilerParams(dimension_semantics=("parallel",)),
    )(x, w, b.reshape(1, Np))
    return out if Np == Nout else out[:, :Nout]


# -----------------------------------------------------------------------------
# One-time probe of pltpu.roll's direction so the corner-shift trick is
# direction-proof (positive shift expected to move element i -> i + shift).
# -----------------------------------------------------------------------------
_ROLL_SHIFTS_UP = None


def _roll_shifts_to_higher_index():
    global _ROLL_SHIFTS_UP
    if _ROLL_SHIFTS_UP is None:
        def kernel(o_ref):
            onehot = jax.lax.broadcasted_iota(jnp.int32, (8, 128), 1) == 0
            o_ref[...] = pltpu.roll(onehot.astype(jnp.float32), 1, axis=1)

        try:
            probe = pl.pallas_call(
                kernel, out_shape=jax.ShapeDtypeStruct((8, 128), jnp.float32))()
            if bool(probe[0, 1] == 1.0):
                _ROLL_SHIFTS_UP = True
            elif bool(probe[0, 127] == 1.0):
                _ROLL_SHIFTS_UP = False
            else:
                _ROLL_SHIFTS_UP = True
        except Exception:
            # interpret/CPU environments: assume jnp.roll semantics
            _ROLL_SHIFTS_UP = True
    return _ROLL_SHIFTS_UP


def _physical_vmem_bytes():
    try:
        return int(getattr(pltpu.get_tpu_info(), "vmem_capacity_bytes", 64 << 20))
    except Exception:
        return 64 << 20


# -----------------------------------------------------------------------------
# Deformable attention core kernel (fused output projection)
# -----------------------------------------------------------------------------
def _make_core_kernel(n_heads, n_levels, n_points, d_head, spatial_shapes,
                      level_starts_pad, sw, roll_up):
    HP = n_heads * n_points
    d_model = n_heads * d_head

    def kernel(value_ref, locx_ref, locy_ref, attw_ref, outw_ref, outb_ref,
               o_ref):
        # value_ref: (1, Len_pad, d_model) bf16 -- resident across the q axis
        # locx/locy/attw_ref: (1, TQ, L*H*P) f32 (attw already softmaxed)
        # outw_ref: (d_model, d_model) f32, outb_ref: (1, d_model) f32
        # o_ref: (1, TQ, d_model) f32 (final module output tile)
        TQ = locx_ref.shape[1]
        # small hoisted iotas: (1, SW_l) column index, broadcast vs (TQ, 1) pos
        col_iotas = [jax.lax.broadcasted_iota(jnp.int32, (1, sw[l]), 1)
                     for l in range(n_levels)]
        head_iota = jax.lax.broadcasted_iota(jnp.int32, (1, d_model), 1)

        def shifted(arr, l, shift):
            # cyclic shift of +shift columns regardless of pltpu.roll direction
            e = shift % sw[l]
            if not roll_up:
                e = (sw[l] - e) % sw[l]
            if e == 0:
                return arr
            return pltpu.roll(arr, e, axis=1)

        out_full = jnp.zeros((TQ, d_model), jnp.float32)
        for m in range(n_heads):
            head_acc = jnp.zeros((TQ, d_model), jnp.float32)
            for l in range(n_levels):
                Hl, Wl = spatial_shapes[l]
                SW = sw[l]
                S = jnp.zeros((TQ, SW), jnp.float32)
                # TODO(synk): at production configs (8 heads x 4 levels x 4
                # points) convert this unrolled point loop to
                # lax.fori_loop(..., unroll=2) to bound vreg live ranges, and
                # build S / one-hots in bfloat16 on v6e/v7x (native bf16 VPU).
                for p in range(n_points):
                    c = l * HP + m * n_points + p
                    lx = locx_ref[0, :, c:c + 1]                     # (TQ, 1)
                    ly = locy_ref[0, :, c:c + 1]
                    ap = attw_ref[0, :, c:c + 1]                     # softmaxed
                    # grid_sample semantics: align_corners=False, zeros padding
                    px = lx * float(Wl) - 0.5
                    py = ly * float(Hl) - 0.5
                    x0f = jnp.floor(px)
                    y0f = jnp.floor(py)
                    fx = px - x0f
                    fy = py - y0f
                    x0 = x0f.astype(jnp.int32)
                    y0 = y0f.astype(jnp.int32)
                    # separable bilinear weights; validity factorizes as
                    # valid(dy, dx) = vy(dy) & vx(dx)
                    wx0 = jnp.where((x0 >= 0) & (x0 <= Wl - 1), 1.0 - fx, 0.0)
                    wx1 = jnp.where((x0 >= -1) & (x0 <= Wl - 2), fx, 0.0)
                    wy0 = jnp.where((y0 >= 0) & (y0 <= Hl - 1), 1.0 - fy, 0.0) * ap
                    wy1 = jnp.where((y0 >= -1) & (y0 <= Hl - 2), fy, 0.0) * ap
                    base = y0 * Wl + x0
                    # wrap negative bases so the cyclic rolls land border
                    # samples on the right column; invalid corners carry
                    # weight 0 and padded value rows are zero, so wrapped junk
                    # never contributes.
                    pos = jnp.where(base < 0, base + SW, base)
                    pos = jnp.where(pos < 0, pos + SW, pos)
                    # ONE full-width compare per point; x/y neighbours derived
                    # with two XLU rolls (factorized bilinear build).
                    onehot = (col_iotas[l] == pos).astype(jnp.float32)  # (TQ,SW)
                    xvec = onehot * wx0 + shifted(onehot * wx1, l, 1)
                    S = S + xvec * wy0 + shifted(xvec * wy1, l, Wl)

                # full-width value slice: rows start on a 128 multiple and the
                # contraction width SW is 128-aligned; N = d_model keeps the
                # MXU result lane-dense.
                # TODO(synk): on v5e with d_model > 128 keep per-head
                # N = d_head matmuls instead (128-wide MXU there).
                v_lvl = value_ref[0, pl.ds(level_starts_pad[l], SW), :]
                head_acc = head_acc + jnp.dot(
                    S.astype(jnp.bfloat16), v_lvl,
                    preferred_element_type=jnp.float32)

            head_mask = ((head_iota >= m * d_head)
                         & (head_iota < (m + 1) * d_head)).astype(jnp.float32)
            out_full = out_full + head_acc * head_mask

        # fused output projection; single lane-dense store of the final tile
        o_ref[0] = (jnp.dot(out_full, outw_ref[...],
                            preferred_element_type=jnp.float32)
                    + outb_ref[...]).astype(o_ref.dtype)

    return kernel


def deform_attn_core(value_pad, locx, locy, attw, out_w, out_b, *, n_heads,
                     n_levels, n_points, d_head, spatial_shapes, tq_max=256):
    """value_pad: (N, Len_pad, d_model) bf16 (levels row-padded to 128 mult),
    locx/locy/attw: (N, Len_q_total, L*H*P) f32 (attw pre-softmaxed, channels
    in (level, head, point) order).  Returns final output (fused out proj)."""
    N, Len_pad, d_model = value_pad.shape
    Lq = locx.shape[1]
    HLP = n_heads * n_levels * n_points

    sw = [_round_up(h * w, 128) for (h, w) in spatial_shapes]
    level_starts_pad, s = [], 0
    for x in sw:
        level_starts_pad.append(s)
        s += x
    assert s == Len_pad

    def vmem_est(tq, value_bufs):
        return (value_bufs * Len_pad * d_model * 2          # resident value (bf16)
                + 2 * 3 * tq * HLP * 4                      # locx/locy/attw streams
                + 2 * tq * d_model * 4                      # output stream
                + 2 * (d_model * d_model + d_model) * 4     # out_w / out_b
                + 6 * tq * max(sw) * 4                      # S / one-hot / xvec temps
                + 2 * tq * d_model * 4)                     # head_acc / out_full

    phys = _physical_vmem_bytes()
    budget = max(phys - (8 << 20), 24 << 20)

    TQ = Lq if Lq <= tq_max else (tq_max // 8) * 8
    while TQ > 128 and vmem_est(TQ, 1) > budget:
        TQ = max(128, ((TQ // 2) // 8) * 8)
    vmem_limit = int(min(budget, max(32 << 20, 2 * vmem_est(TQ, 2))))

    grid = (N, pl.cdiv(Lq, TQ))
    # TODO(synk): on v7x with small N, core-split the q axis across the 2 TCs
    # (CORE_PARALLEL) instead of relying on the batch axis for megacore.
    kernel = _make_core_kernel(n_heads, n_levels, n_points, d_head,
                               tuple(spatial_shapes), tuple(level_starts_pad),
                               tuple(sw), _roll_shifts_to_higher_index())

    def run(value_pipeline_mode):
        if value_pipeline_mode is not None:
            value_spec = pl.BlockSpec((1, Len_pad, d_model),
                                      lambda b, q: (b, 0, 0),
                                      pipeline_mode=value_pipeline_mode)
        else:
            value_spec = pl.BlockSpec((1, Len_pad, d_model),
                                      lambda b, q: (b, 0, 0))
        return pl.pallas_call(
            kernel,
            out_shape=jax.ShapeDtypeStruct((N, Lq, d_model), jnp.float32),
            grid=grid,
            in_specs=[
                value_spec,
                pl.BlockSpec((1, TQ, HLP), lambda b, q: (b, q, 0)),
                pl.BlockSpec((1, TQ, HLP), lambda b, q: (b, q, 0)),
                pl.BlockSpec((1, TQ, HLP), lambda b, q: (b, q, 0)),
                pl.BlockSpec((d_model, d_model), lambda b, q: (0, 0)),
                pl.BlockSpec((1, d_model), lambda b, q: (0, 0)),
            ],
            out_specs=pl.BlockSpec((1, TQ, d_model), lambda b, q: (b, q, 0)),
            compiler_params=pltpu.CompilerParams(
                dimension_semantics=("parallel", "parallel"),
                vmem_limit_bytes=vmem_limit),
        )(value_pad, locx, locy, attw, out_w, out_b.reshape(1, d_model))

    # single-buffer the resident value tensor (its block index is constant
    # along the q axis, so double-buffering only wastes VMEM); fall back to
    # default buffering if this JAX build rejects pipeline_mode.
    buffered = getattr(pl, "Buffered", None)
    if buffered is not None:
        try:
            return run(buffered(1))
        except Exception:
            pass
    return run(None)


# -----------------------------------------------------------------------------
# Parameter init (mirrors _reset_parameters shapes/values)
# -----------------------------------------------------------------------------
def init_params(key, d_model, n_levels, n_heads, n_points):
    k_val, k_out = jax.random.split(key, 2)

    def xavier(k, fan_in, fan_out):
        a = math.sqrt(6.0 / (fan_in + fan_out))
        return jax.random.uniform(k, (fan_in, fan_out), jnp.float32, -a, a)

    thetas = jnp.arange(n_heads, dtype=jnp.float32) * (2.0 * math.pi / n_heads)
    grid = jnp.stack([jnp.cos(thetas), jnp.sin(thetas)], -1)           # (H, 2)
    grid = grid / jnp.max(jnp.abs(grid), axis=-1, keepdims=True)
    grid = jnp.tile(grid[:, None, None, :], (1, 1, n_points, 1))       # (H,1,P,2)
    grid = grid * jnp.arange(1, n_points + 1, dtype=jnp.float32)[None, None, :, None]
    off_bias = grid.reshape(-1)                                        # (H*P*2,)

    return dict(
        off_w=[jnp.zeros((d_model, n_heads * n_points * 2), jnp.float32)
               for _ in range(n_levels)],
        off_b=[off_bias for _ in range(n_levels)],
        attw_w=[jnp.zeros((d_model, n_heads * n_points), jnp.float32)
                for _ in range(n_levels)],
        attw_b=[jnp.zeros((n_heads * n_points,), jnp.float32)
                for _ in range(n_levels)],
        value_w=xavier(k_val, d_model, d_model),
        value_b=jnp.zeros((d_model,), jnp.float32),
        out_w=xavier(k_out, d_model, d_model),
        out_b=jnp.zeros((d_model,), jnp.float32),
    )


# -----------------------------------------------------------------------------
# Forward pass (matches MSDeformAttn_STATrans_v2.forward semantics)
# -----------------------------------------------------------------------------
def ms_deform_attn_statrans_v2_forward(params, seq_query_list, reference_points,
                                       input_flatten, spatial_shapes_py,
                                       level_start_index, input_padding_mask=None,
                                       *, d_model, n_levels, n_heads, n_points):
    # level_start_index is recomputed from the static spatial shapes.
    del level_start_index
    N, Len_in, C = input_flatten.shape
    assert C == d_model
    L = n_levels
    Len_q = Len_in // L
    d_head = d_model // n_heads
    HP = n_heads * n_points
    HP2 = HP * 2

    # value projection -> bf16 (bf16 operands, f32 accumulation)
    v = pallas_linear(input_flatten.reshape(N * Len_in, C),
                      params["value_w"], params["value_b"],
                      out_dtype=jnp.bfloat16,
                      compute_dtype=jnp.bfloat16).reshape(N, Len_in, C)
    if input_padding_mask is not None:
        v = jnp.where(input_padding_mask[..., None], jnp.bfloat16(0), v)

    # pad each level's rows to a multiple of 128 so every kernel-side value
    # slice and MXU contraction width is lane/sublane aligned.
    sw = [_round_up(h * w, 128) for (h, w) in spatial_shapes_py]
    pieces, s = [], 0
    for l, (h, w) in enumerate(spatial_shapes_py):
        hw = h * w
        piece = v[:, s:s + hw]
        if sw[l] > hw:
            piece = jnp.concatenate(
                [piece, jnp.zeros((N, sw[l] - hw, C), v.dtype)], axis=1)
        pieces.append(piece)
        s += hw
    assert s == Len_in
    v_pad = pieces[0] if len(pieces) == 1 else jnp.concatenate(pieces, axis=1)

    # fused per-query-level projections in natural (source-level, head, point)
    # channel order -> downstream steps are pure reshapes (no transposes).
    if reference_points.shape[-1] == 2:
        norm = jnp.array([[w, h] for (h, w) in spatial_shapes_py], jnp.float32)
        norm = norm.reshape(1, 1, L, 1, 1, 2)
    elif reference_points.shape[-1] != 4:
        raise ValueError("Last dim of reference_points must be 2 or 4")

    locx_list, locy_list, aw_list = [], [], []
    for i in range(L):
        q_i = jnp.stack(seq_query_list[i], axis=2)           # (N, Len_q, L, C)
        w_cat = jnp.concatenate([params["off_w"][i], params["attw_w"][i]], axis=1)
        b_cat = jnp.concatenate([params["off_b"][i], params["attw_b"][i]], axis=0)
        proj = pallas_linear(q_i.reshape(N * Len_q * L, C), w_cat, b_cat)
        proj = proj.reshape(N, Len_q, L, HP2 + HP)
        off = proj[..., :HP2].reshape(N, Len_q, L, n_heads, n_points, 2)
        logits = proj[..., HP2:].reshape(N, Len_q, L, n_heads, n_points)
        # softmax over (source-level, point) per head done in XLA so the core
        # kernel reads pre-normalized weights (no in-kernel reductions).
        mx = jnp.max(logits, axis=(2, 4), keepdims=True)
        ex = jnp.exp(logits - mx)
        aw = ex / jnp.sum(ex, axis=(2, 4), keepdims=True)

        ref_i = reference_points[:, i * Len_q:(i + 1) * Len_q]
        if reference_points.shape[-1] == 2:
            loc = ref_i[:, :, :, None, None, :] + off / norm
        else:
            loc = (ref_i[:, :, :, None, None, :2]
                   + off / n_points * ref_i[:, :, :, None, None, 2:] * 0.5)
        locx_list.append(loc[..., 0].reshape(N, Len_q, L * HP))
        locy_list.append(loc[..., 1].reshape(N, Len_q, L * HP))
        aw_list.append(aw.reshape(N, Len_q, L * HP))

    locx = jnp.concatenate(locx_list, axis=1)                # (N, Len_in, HLP)
    locy = jnp.concatenate(locy_list, axis=1)
    attw = jnp.concatenate(aw_list, axis=1)

    # core kernel also applies the fused output projection
    return deform_attn_core(v_pad, locx, locy, attw,
                            params["out_w"], params["out_b"],
                            n_heads=n_heads, n_levels=n_levels,
                            n_points=n_points, d_head=d_head,
                            spatial_shapes=spatial_shapes_py)


# -----------------------------------------------------------------------------
# Pure-JAX reference (f32, value quantized to bf16 to match the MXU path)
# -----------------------------------------------------------------------------
def _reference_forward(params, seq_query_list, reference_points, input_flatten,
                       spatial_shapes_py, input_padding_mask=None, *,
                       d_model, n_levels, n_heads, n_points):
    HI = jax.lax.Precision.HIGHEST
    N, Len_in, C = input_flatten.shape
    Len_q = Len_in // n_levels
    d_head = d_model // n_heads

    v = jnp.dot(input_flatten.reshape(-1, C), params["value_w"],
                precision=HI) + params["value_b"]
    v = v.reshape(N, Len_in, C)
    if input_padding_mask is not None:
        v = jnp.where(input_padding_mask[..., None], 0.0, v)
    v = v.astype(jnp.bfloat16).astype(jnp.float32)       # match Pallas bf16 value
    v = v.reshape(N, Len_in, n_heads, d_head)

    off_list, aw_list = [], []
    for i in range(n_levels):
        offs, aws = [], []
        for j in range(n_levels):
            q = seq_query_list[i][j].reshape(-1, C)
            o = (jnp.dot(q, params["off_w"][i], precision=HI)
                 + params["off_b"][i]).reshape(N, Len_q, n_heads, 1, n_points, 2)
            a = (jnp.dot(q, params["attw_w"][i], precision=HI)
                 + params["attw_b"][i]).reshape(N, Len_q, n_heads, n_points)
            offs.append(o)
            aws.append(a)
        off_list.append(jnp.concatenate(offs, axis=-3))
        aw_list.append(jnp.concatenate(aws, axis=-1))
    sampling_offsets = jnp.concatenate(off_list, axis=1)
    attn = jax.nn.softmax(jnp.concatenate(aw_list, axis=1), axis=-1)
    attn = attn.reshape(N, Len_in, n_heads, n_levels, n_points)

    if reference_points.shape[-1] == 2:
        norm = jnp.array([[w, h] for (h, w) in spatial_shapes_py], jnp.float32)
        loc = (reference_points[:, :, None, :, None, :]
               + sampling_offsets / norm[None, None, None, :, None, :])
    else:
        loc = (reference_points[:, :, None, :, None, :2]
               + sampling_offsets / n_points
               * reference_points[:, :, None, :, None, 2:] * 0.5)

    out = jnp.zeros((N, Len_in, n_heads, d_head), jnp.float32)
    start = 0
    for l, (Hl, Wl) in enumerate(spatial_shapes_py):
        HWl = Hl * Wl
        v_l = jnp.transpose(v[:, start:start + HWl], (0, 2, 1, 3))  # (N,H,HW,Dh)
        start += HWl
        px = loc[:, :, :, l, :, 0] * Wl - 0.5                       # (N,Lq,H,P)
        py = loc[:, :, :, l, :, 1] * Hl - 0.5
        x0 = jnp.floor(px)
        y0 = jnp.floor(py)
        fx = px - x0
        fy = py - y0
        a_l = attn[:, :, :, l, :]
        for dy in (0, 1):
            for dx in (0, 1):
                xi = x0 + dx
                yi = y0 + dy
                wgt = (fx if dx else 1.0 - fx) * (fy if dy else 1.0 - fy)
                valid = (xi >= 0) & (xi < Wl) & (yi >= 0) & (yi < Hl)
                xi_c = jnp.clip(xi, 0, Wl - 1).astype(jnp.int32)
                yi_c = jnp.clip(yi, 0, Hl - 1).astype(jnp.int32)
                idx = yi_c * Wl + xi_c                              # (N,Lq,H,P)
                idx_t = jnp.transpose(idx, (0, 2, 1, 3)).reshape(N, n_heads, -1)
                g = jnp.take_along_axis(v_l, idx_t[..., None], axis=2)
                g = g.reshape(N, n_heads, Len_in, n_points, d_head)
                g = jnp.transpose(g, (0, 2, 1, 3, 4))               # (N,Lq,H,P,Dh)
                w_full = jnp.where(valid, wgt, 0.0) * a_l
                out = out + jnp.sum(w_full[..., None] * g, axis=3)
    out = out.reshape(-1, d_model)
    out = jnp.dot(out, params["out_w"], precision=HI) + params["out_b"]
    return out.reshape(N, Len_in, d_model)


# -----------------------------------------------------------------------------
if __name__ == "__main__":
    key = jax.random.PRNGKey(0)
    N = 2
    D_MODEL, N_LEVELS, N_HEADS, N_POINTS = 32, 2, 4, 2
    H = W = 4
    HW = H * W
    LEN_Q = HW
    LEN_IN = N_LEVELS * HW
    spatial_shapes_py = tuple((H, W) for _ in range(N_LEVELS))
    level_start_index = jnp.array([0, HW], dtype=jnp.int32)

    k1, k2, k3, kp, kw = jax.random.split(key, 5)
    params = init_params(kp, D_MODEL, N_LEVELS, N_HEADS, N_POINTS)
    # perturb the zero-initialised projection weights so the test exercises
    # non-uniform attention weights and per-query sampling offsets.
    wkeys = jax.random.split(kw, 2 * N_LEVELS)
    params["off_w"] = [0.05 * jax.random.normal(wkeys[i], params["off_w"][i].shape,
                                                jnp.float32)
                       for i in range(N_LEVELS)]
    params["attw_w"] = [0.5 * jax.random.normal(wkeys[N_LEVELS + i],
                                                params["attw_w"][i].shape,
                                                jnp.float32)
                        for i in range(N_LEVELS)]

    input_flatten = jax.random.normal(k1, (N, LEN_IN, D_MODEL), jnp.float32)
    reference_points = jax.random.uniform(k2, (N, LEN_IN, N_LEVELS, 2), jnp.float32)
    qkeys = jax.random.split(k3, N_LEVELS * N_LEVELS)
    seq_query_list = [
        [jax.random.normal(qkeys[i * N_LEVELS + j], (N, LEN_Q, D_MODEL), jnp.float32)
         for j in range(N_LEVELS)]
        for i in range(N_LEVELS)
    ]

    out = ms_deform_attn_statrans_v2_forward(
        params, seq_query_list, reference_points, input_flatten,
        spatial_shapes_py, level_start_index, input_padding_mask=None,
        d_model=D_MODEL, n_levels=N_LEVELS, n_heads=N_HEADS, n_points=N_POINTS)
    out = jax.block_until_ready(out)

    assert out.shape == (N, LEN_IN, D_MODEL)
    assert bool(jnp.all(jnp.isfinite(out)))

    ref = _reference_forward(
        params, seq_query_list, reference_points, input_flatten,
        spatial_shapes_py, None,
        d_model=D_MODEL, n_levels=N_LEVELS, n_heads=N_HEADS, n_points=N_POINTS)
    max_err = float(jnp.max(jnp.abs(out - ref)))
    assert max_err < 0.15, f"mismatch vs reference: {max_err}"
    print("KERNEL_OK")
</pallas_src>

<mosaic_0001>
module attributes {stable_mosaic.version = 11 : i64} {
  func.func @kernel(%arg0: i32, %arg1: memref<64x32xf32, #tpu.memory_space<vmem>>, %arg2: memref<32x128xbf16, #tpu.memory_space<vmem>>, %arg3: memref<1x128xf32, #tpu.memory_space<vmem>>, %arg4: memref<64x128xbf16, #tpu.memory_space<vmem>>) attributes {dimension_semantics = [#tpu.dimension_semantics<parallel>], iteration_bounds = array<i64: 1>, scalar_prefetch = 0 : i64, scratch_operands = 0 : i64, tpu.core_type = #tpu.core_type<tc>, window_params = [{transform_indices = @transform_0, window_bounds = array<i64: 64, 32>}, {pipeline_mode = #tpu.pipeline_mode<synchronous>, transform_indices = @transform_1, window_bounds = array<i64: 32, 128>}, {pipeline_mode = #tpu.pipeline_mode<synchronous>, transform_indices = @transform_2, window_bounds = array<i64: 1, 128>}, {transform_indices = @transform_3, window_bounds = array<i64: 64, 128>}]} {
    %c0 = arith.constant 0 : index
    %c0_0 = arith.constant 0 : index
    %0 = vector.load %arg1[%c0, %c0_0] : memref<64x32xf32, #tpu.memory_space<vmem>>, vector<64x32xf32>
    %1 = arith.truncf %0 : vector<64x32xf32> to vector<64x32xbf16>
    %c0_1 = arith.constant 0 : index
    %c0_2 = arith.constant 0 : index
    %2 = vector.load %arg2[%c0_1, %c0_2] : memref<32x128xbf16, #tpu.memory_space<vmem>>, vector<32x128xbf16>
    %cst = arith.constant dense<0.000000e+00> : vector<64x128xf32>
    %3 = tpu.matmul %1, %2, %cst {dimension_numbers = #tpu.dot_dimension_numbers<[1], [0], [0], [1], [0, 0, 1, 1], [], []>} : vector<64x32xbf16>, vector<32x128xbf16>, vector<64x128xf32> -> vector<64x128xf32>
    %c0_3 = arith.constant 0 : index
    %c0_4 = arith.constant 0 : index
    %4 = vector.load %arg3[%c0_3, %c0_4] : memref<1x128xf32, #tpu.memory_space<vmem>>, vector<1x128xf32>
    %5 = vector.broadcast %4 : vector<1x128xf32> to vector<64x128xf32>
    %6 = arith.addf %3, %5 : vector<64x128xf32>
    %7 = arith.truncf %6 : vector<64x128xf32> to vector<64x128xbf16>
    %c0_5 = arith.constant 0 : index
    %c0_6 = arith.constant 0 : index
    %8 = vector.load %arg4[%c0_5, %c0_6] : memref<64x128xbf16, #tpu.memory_space<vmem>>, vector<64x128xbf16>
    tpu.vector_store %arg4[%c0_5, %c0_6], %7 {strides = array<i32>} : memref<64x128xbf16, #tpu.memory_space<vmem>>, vector<64x128xbf16>,
    return
  }
  func.func @transform_0(%arg0: i32) -> (i32, i32) {
    %c0_i32 = arith.constant 0 : i32
    %c0_i32_0 = arith.constant 0 : i32
    return %arg0, %c0_i32 : i32, i32
  }
  func.func @transform_1(%arg0: i32) -> (i32, i32) {
    %c0_i32 = arith.constant 0 : i32
    %c0_i32_0 = arith.constant 0 : i32
    %c0_i32_1 = arith.constant 0 : i32
    return %c0_i32, %c0_i32_0 : i32, i32
  }
  func.func @transform_2(%arg0: i32) -> (i32, i32) {
    %c0_i32 = arith.constant 0 : i32
    %c0_i32_0 = arith.constant 0 : i32
    %c0_i32_1 = arith.constant 0 : i32
    return %c0_i32, %c0_i32_0 : i32, i32
  }
  func.func @transform_3(%arg0: i32) -> (i32, i32) {
    %c0_i32 = arith.constant 0 : i32
    %c0_i32_0 = arith.constant 0 : i32
    return %arg0, %c0_i32 : i32, i32
  }
}

</mosaic_0001>

<llo_original>
// kernel: tpu_custom_call.1
$region0: #{tpu_custom_call.1}
  #allocation0 [shape = 'u32[]', space=smem, size = 0x4, offset = 0x4, fixed_abs, tag = 'smem constant byte address 0x4 - core index']
  #allocation1 [shape = 'u32[144,128]{1,0:T(1,128)}', space=vmem, size = 0x12000, scoped, tag = 'internal scratch']
  %s0 = inlined_call_operand.vmem [shape: f32[64,32], index: 0, kind: input, shape index: {}]
  %s1 = inlined_call_operand.vmem [shape: bf16[32,128], index: 1, kind: input, shape index: {}]
  %s2 = inlined_call_operand.vmem [shape: f32[1,128], index: 2, kind: input, shape index: {}]
  %s3 = inlined_call_operand.hbm [shape: bf16[64,128], index: 3, kind: output, shape index: {}]
  %s4 = sld [smem:[#allocation0]]
  $region22: #{tpu_custom_call.1} parent=0
    _
  %s6 = ssub.s32 1, %s4
  %s7 = scalar_select 0, %s6, %s4
  $region1: #{tpu_custom_call.1} parent=0
    #allocation2 [shape = 'u8[16384]{0}', space=vmem, size = 0x4000, scoped, tag = 'output window, operand 0, single buffered']
    #allocation3 [shape = 's32[1]{0}', space=sflag, size = 0x4, scoped, tag = 'scoped memory for tpu_custom_call.1']
    %8 = vsyncpa [#allocation3], 0
    // Predicated region
    $region2: #{tpu_custom_call.1} parent=1 // pred_check
      _
    $region3: #{tpu_custom_call.1} parent=1 // pred_check_branch
      %10 = sbr.rel (0) target = $region5
    $region4: #{tpu_custom_call.1} parent=1 // pred_region
      _
    $region5: #{tpu_custom_call.1} parent=1 // pred_fallthru
      _
    // Predicated region
    $region6: #{tpu_custom_call.1} parent=1 // pred_check
      _
    $region7: #{tpu_custom_call.1} parent=1 // pred_check_branch
      %12 = sbr.rel (0) target = $region9
    $region8: #{tpu_custom_call.1} parent=1 // pred_region
      _
    $region9: #{tpu_custom_call.1} parent=1 // pred_fallthru
      _
    // Predicated region
    $region10: #{tpu_custom_call.1} parent=1 // pred_check
      _
    $region11: #{tpu_custom_call.1} parent=1 // pred_check_branch
      %14 = sbr.rel (0) target = $region13
    $region12: #{tpu_custom_call.1} parent=1 // pred_region
      _
    $region13: #{tpu_custom_call.1} parent=1 // pred_fallthru
      _
    %v16 = vld [vmem:[%s0] sm:$0xff]
    %v17 = vld [vmem:[%s0 + $0x8] sm:$0xff]
    %v18 = vld [vmem:[%s0 + $0x10] sm:$0xff]
    %v19 = vld [vmem:[%s0 + $0x18] sm:$0xff]
    %v20 = vld [vmem:[%s0 + $0x20] sm:$0xff]
    %v21 = vld [vmem:[%s0 + $0x28] sm:$0xff]
    %v22 = vld [vmem:[%s0 + $0x30] sm:$0xff]
    %v23 = vld [vmem:[%s0 + $0x38] sm:$0xff]
    %v24 = vpack.c.bf16 %v17, %v16
    %v25 = vpack.c.bf16 %v19, %v18
    %v26 = vpack.c.bf16 %v21, %v20
    %v27 = vpack.c.bf16 %v23, %v22
    %v28 = vld [vmem:[%s1] sm:$0xf]
    %v29 = vld [vmem:[%s1 + $0x4] sm:$0xf]
    %v30 = vld [vmem:[%s1 + $0x8] sm:$0xf]
    %v31 = vld [vmem:[%s1 + $0xc] sm:$0xf]
    %v32 = vld [vmem:[%s2] sm:$0x1]
    %v34 = vlaneseq
    %v35 = vshrl.u32 %v34, 7
    %v36 = vsub.s32 0, %v35
    %v37 = vrot.slane %v32, %v36
    %v43 = vunpack.c.l.b16 %v28
    %v44 = vunpack.c.l.b16 %v29
    %v45 = vunpack.c.l.b16 %v30
    %v46 = vunpack.c.l.b16 %v31
    %v47 = vpack.c.b16 %v44, %v43
    %v48 = vpack.c.b16 %v46, %v45
    %vm51 = vcmask 261120
    %v53 = vsel %vm51, %v24, 0
    %v56 = vsel %vm51, %v25, 0
    %v59 = vsel %vm51, %v26, 0
    %v62 = vsel %vm51, %v27, 0
    %64 = vmatprep.subr.bf16.mxu0 0
    %65 = vmatpush1.bf16.msra.mxu0 %v47
    %66 = vmatprep.subr.bf16.mxu0 0
    %67 = vmatpush1.bf16.msra.mxu0 %v48
    %68 = vmatprep.subr.bf16.mxu0 0
    %69 = vmatpush1.bf16.msra.mxu0 0
    %70 = vmatprep.subr.bf16.mxu0 0
    %71 = vmatpush1.bf16.msra.mxu0 0
    %72 = vmatprep.subr.bf16.mxu0 0
    %73 = vmatpush1.bf16.msra.mxu0 0
    %74 = vmatprep.subr.bf16.mxu0 0
    %75 = vmatpush1.bf16.msra.mxu0 0
    %76 = vmatprep.subr.bf16.mxu0 0
    %77 = vmatpush1.bf16.msra.mxu0 0
    %78 = vmatprep.subr.bf16.mxu0 0
    %79 = vmatpush1.bf16.msra.mxu0 0
    %80 = vmatprep.subr.bf16.mxu0 0
    %81 = vmatpush1.bf16.msra.mxu0 0
    %82 = vmatprep.subr.bf16.mxu0 0
    %83 = vmatpush1.bf16.msra.mxu0 0
    %84 = vmatprep.subr.bf16.mxu0 0
    %85 = vmatpush1.bf16.msra.mxu0 0
    %86 = vmatprep.subr.bf16.mxu0 0
    %87 = vmatpush1.bf16.msra.mxu0 0
    %88 = vmatprep.subr.bf16.mxu0 0
    %89 = vmatpush1.bf16.msra.mxu0 0
    %90 = vmatprep.subr.bf16.mxu0 0
    %91 = vmatpush1.bf16.msra.mxu0 0
    %92 = vmatprep.subr.bf16.mxu0 0
    %93 = vmatpush1.bf16.msra.mxu0 0
    %94 = vmatprep.subr.bf16.mxu0 0
    %95 = vmatpush1.bf16.msra.mxu0 0
    %96 = vmatprep.mubr.bf16.mxu0 0
    %97 = vmatmul.mubr.bf16.gmra.mrb[0].mxu0 %v53
    %v98 = vpop.f32.mrb[0].mxu0
    %v99 = vadd.f32 %v37, %v98
    %v100 = vpop.f32.mrb[0].mxu0
    %v101 = vpop.f32.mrb[0].mxu0
    %v102 = vadd.f32 %v37, %v101
    %v103 = vpop.f32.mrb[0].mxu0
    %104 = vmatprep.mubr.bf16.mxu0 0
    %105 = vmatmul.mubr.bf16.gmra.mrb[0].mxu0 %v56
    %v106 = vpop.f32.mrb[0].mxu0
    %v107 = vadd.f32 %v37, %v106
    %v108 = vpop.f32.mrb[0].mxu0
    %v109 = vpop.f32.mrb[0].mxu0
    %v110 = vadd.f32 %v37, %v109
    %v111 = vpop.f32.mrb[0].mxu0
    %112 = vmatprep.mubr.bf16.mxu0 0
    %113 = vmatmul.mubr.bf16.gmra.mrb[0].mxu0 %v59
    %v114 = vpop.f32.mrb[0].mxu0
    %v115 = vadd.f32 %v37, %v114
    %v116 = vpop.f32.mrb[0].mxu0
    %v117 = vpop.f32.mrb[0].mxu0
    %v118 = vadd.f32 %v37, %v117
    %v119 = vpop.f32.mrb[0].mxu0
    %120 = vmatprep.mubr.bf16.mxu0 0
    %121 = vmatmul.mubr.bf16.gmra.mrb[0].mxu0 %v62
    %v122 = vpop.f32.mrb[0].mxu0
    %v123 = vadd.f32 %v37, %v122
    %v124 = vpop.f32.mrb[0].mxu0
    %v125 = vpop.f32.mrb[0].mxu0
    %v126 = vadd.f32 %v37, %v125
    %v127 = vpop.f32.mrb[0].mxu0
    %128 = vdwg.mxu0
    %v129 = vpack.c.bf16 %v102, %v99
    %v130 = vpack.c.bf16 %v110, %v107
    %v131 = vpack.c.bf16 %v118, %v115
    %v132 = vpack.c.bf16 %v126, %v123
    %v137 = vunpack.c.l.b16 %v129
    %v138 = vunpack.c.h.b16 %v129
    %v139 = vunpack.c.l.b16 %v130
    %v140 = vunpack.c.h.b16 %v130
    %v141 = vunpack.c.l.b16 %v131
    %v142 = vunpack.c.h.b16 %v131
    %v143 = vunpack.c.l.b16 %v132
    %v144 = vunpack.c.h.b16 %v132
    %v145 = vpack.c.b16 %v137, %v137
    %v146 = vpack.c.b16 %v138, %v138
    %v147 = vpack.c.b16 %v139, %v139
    %v148 = vpack.c.b16 %v140, %v140
    %v149 = vpack.c.b16 %v141, %v141
    %v150 = vpack.c.b16 %v142, %v142
    %v151 = vpack.c.b16 %v143, %v143
    %v152 = vpack.c.b16 %v144, %v144
    %161 = vst [vmem:[#allocation2] sm:$0xf] %v145
    %162 = vst [vmem:[#allocation2 + $0x4] sm:$0xf] %v146
    %163 = vst [vmem:[#allocation2 + $0x8] sm:$0xf] %v147
    %164 = vst [vmem:[#allocation2 + $0xc] sm:$0xf] %v148
    %165 = vst [vmem:[#allocation2 + $0x10] sm:$0xf] %v149
    %166 = vst [vmem:[#allocation2 + $0x14] sm:$0xf] %v150
    %167 = vst [vmem:[#allocation2 + $0x18] sm:$0xf] %v151
    %168 = vst [vmem:[#allocation2 + $0x1c] sm:$0xf] %v152
    // Predicated region
    $region14: #{tpu_custom_call.1} parent=1 // pred_check
      _
    $region15: #{tpu_custom_call.1} parent=1 // pred_check_branch
      %170 = sbr.rel (0) target = $region17
    $region16: #{tpu_custom_call.1} parent=1 // pred_region
      %s172 = ssub.s32 512, 512
      %173 = vsyncadd [#allocation3], %s172
      %s174 = sshll.u32 [#allocation2], 4
      %s175 = int_to_ptr.vmem [resolvable:$true] %s174
      %180 = dma.vmem_to_hbm [thread:$0]  %s175, 512, %s3, [#allocation3], 64, 64, 4
    $region17: #{tpu_custom_call.1} parent=1 // pred_fallthru
      _
    // Predicated region
    $region18: #{tpu_custom_call.1} parent=1 // pred_check
      _
    $region19: #{tpu_custom_call.1} parent=1 // pred_check_branch
      %182 = sbr.rel (0) target = $region21
    $region20: #{tpu_custom_call.1} parent=1 // pred_region
      %183 = dma.done [#allocation3], 512
    $region21: #{tpu_custom_call.1} parent=1 // pred_fallthru
      _
    %184 = vsyncpa [#allocation3], 1

</llo_original>
